<compile_context>
chip_gen: v7x
topology: tpu7x:2x2x1
jax: 0.10.0
libtpu: 0.0.40
codegen_flags: <defaults>
</compile_context>

<pallas_src>
import functools

import jax
import jax.numpy as jnp
from jax.experimental import pallas as pl
from jax.experimental.pallas import tpu as pltpu

_BN_EPS = 1e-5
_LANE = 128


def _round_up(n, m):
    return ((n + m - 1) // m) * m


def _fused_mlp_kernel(*refs, n_layers, inv_batch):
    """All layers fused; activations stay on-chip, single HBM write at the end.

    refs = (x, w0, p0, w1, p1, ..., w_{L-1}, p_{L-1}, out)
      w_s : (Din_s, Dout_s)  pre-transposed, zero-padded to lane-dense Dout
      p_s : (3, Dout_s)      packed [bias; gamma; beta]
    """
    x_ref = refs[0]
    o_ref = refs[1 + 2 * n_layers]

    h = x_ref[...]                                            # (B, D0), f32
    for s in range(n_layers):
        w = refs[1 + 2 * s][...]                              # (Din, Dout)
        p = refs[2 + 2 * s][...]                              # (3, Dout)

        # Linear (MXU) + bias.
        y = jnp.dot(h, w, preferred_element_type=jnp.float32) + p[0:1, :]

        # BatchNorm1d (training-mode batch stats), single-pass sum / sum-of-squares.
        mean = jnp.sum(y, axis=0, keepdims=True) * inv_batch
        var = jnp.sum(y * y, axis=0, keepdims=True) * inv_batch - mean * mean
        var = jnp.maximum(var, 0.0)                           # guard rounding negatives
        y = (y - mean) * jax.lax.rsqrt(var + _BN_EPS) * p[1:2, :] + p[2:3, :]

        if s < n_layers - 1:                                  # trailing ReLU was dropped
            y = jnp.maximum(y, 0.0)
        h = y

    o_ref[...] = h.astype(o_ref.dtype)


class MLPPallas:
    """Pallas port of scdiff/ext/gears/model.py::MLP (forward pass only)."""

    def __init__(self, sizes, batch_norm=True, last_layer_act="linear", key=None):
        assert batch_norm, "This port implements the batch_norm=True configuration."
        del last_layer_act  # unused in the PyTorch forward(), kept for signature parity
        if key is None:
            key = jax.random.PRNGKey(0)
        self.sizes = list(sizes)
        self.n_layers = len(sizes) - 1

        self.raw_params = []    # unpadded params (for the pure-JAX reference)
        self.layer_args = []    # pre-transposed, lane-padded kernel operands
        for s in range(self.n_layers):
            key, kw, kb = jax.random.split(key, 3)
            din, dout = sizes[s], sizes[s + 1]
            # Deterministic synthetic init (shapes match torch.nn.Linear(din, dout)).
            w = jax.random.normal(kw, (dout, din), jnp.float32) * (1.0 / jnp.sqrt(din))
            b = jax.random.normal(kb, (dout,), jnp.float32) * 0.01
            gamma = jnp.ones((dout,), jnp.float32)   # BatchNorm1d default weight
            beta = jnp.zeros((dout,), jnp.float32)   # BatchNorm1d default bias
            self.raw_params.append((w, b, gamma, beta))

            # Build padded / pre-transposed operands ONCE (no per-forward transpose).
            din_pad = din if s == 0 else _round_up(din, _LANE)   # prev layer output is padded
            dout_pad = _round_up(dout, _LANE)
            w_t = jnp.zeros((din_pad, dout_pad), jnp.float32).at[:din, :dout].set(w.T)
            p = jnp.zeros((3, dout_pad), jnp.float32)
            p = p.at[0, :dout].set(b)
            p = p.at[1, :dout].set(gamma)
            p = p.at[2, :dout].set(beta)
            self.layer_args.append((w_t, p))

        self.out_pad = _round_up(sizes[-1], _LANE)

    def __call__(self, x):
        x = x.astype(jnp.float32)
        B = x.shape[0]

        flat_args = [x]
        in_specs = [pl.BlockSpec(x.shape, lambda i: (0, 0))]
        flops = 0
        transcendentals = 0
        bytes_accessed = (x.size + B * self.out_pad) * 4
        for (w_t, p) in self.layer_args:
            flat_args += [w_t, p]
            in_specs += [
                pl.BlockSpec(w_t.shape, lambda i: (0, 0)),
                pl.BlockSpec(p.shape, lambda i: (0, 0)),
            ]
            flops += 2 * B * w_t.shape[0] * w_t.shape[1] + 8 * B * w_t.shape[1]
            transcendentals += w_t.shape[1]
            bytes_accessed += (w_t.size + p.size) * 4

        # Everything (weights + activations) is VMEM-resident for one grid step.
        # TODO(synk): layers whose padded (Din, Dout) weight no longer fits VMEM need a
        # Dout/K-tiled per-layer fallback; unnecessary at these sizes.
        vmem_needed = bytes_accessed + x.size * 4
        vmem_limit = int(min(64 * 2**20, max(32 * 2**20, 2 * vmem_needed)))

        kernel = functools.partial(
            _fused_mlp_kernel, n_layers=self.n_layers, inv_batch=1.0 / B
        )
        out_padded = pl.pallas_call(
            kernel,
            out_shape=jax.ShapeDtypeStruct((B, self.out_pad), jnp.float32),
            grid=(1,),
            in_specs=in_specs,
            out_specs=pl.BlockSpec((B, self.out_pad), lambda i: (0, 0)),
            compiler_params=pltpu.CompilerParams(
                dimension_semantics=("arbitrary",),
                vmem_limit_bytes=vmem_limit,
            ),
            cost_estimate=pl.CostEstimate(
                flops=flops,
                transcendentals=transcendentals,
                bytes_accessed=bytes_accessed,
            ),
        )(*flat_args)

        # Drop the lane-padding of the final layer.
        return out_padded[:, : self.sizes[-1]]


def _reference_forward(mlp, x):
    """Pure-JAX reference mirroring the PyTorch forward (training-mode BN)."""
    n_layers = len(mlp.raw_params)
    h = x.astype(jnp.float32)
    for s, (w, b, gamma, beta) in enumerate(mlp.raw_params):
        y = h @ w.T + b
        mean = jnp.mean(y, axis=0, keepdims=True)
        var = jnp.mean((y - mean) ** 2, axis=0, keepdims=True)
        y = (y - mean) / jnp.sqrt(var + _BN_EPS) * gamma + beta
        if s < n_layers - 1:
            y = jnp.maximum(y, 0.0)
        h = y
    return h


if __name__ == "__main__":
    key = jax.random.PRNGKey(0)
    sizes = [32, 64, 16]          # 2 Linear+BN blocks, ReLU only after the first
    batch = 8

    kx, kparams = jax.random.split(key)
    x = jax.random.normal(kx, (batch, sizes[0]), jnp.float32)

    mlp = MLPPallas(sizes, batch_norm=True, last_layer_act="linear", key=kparams)

    out = jax.block_until_ready(mlp(x))

    ref = _reference_forward(mlp, x)
    assert out.shape == (batch, sizes[-1])
    assert jnp.allclose(out, ref, atol=1e-4, rtol=1e-4), "Pallas output mismatch vs reference"

    print("KERNEL_OK")
</pallas_src>

<mosaic_0001>
module attributes {stable_mosaic.version = 11 : i64} {
  func.func @_fused_mlp_kernel(%arg0: i32, %arg1: memref<8x32xf32, #tpu.memory_space<vmem>>, %arg2: memref<32x128xf32, #tpu.memory_space<vmem>>, %arg3: memref<3x128xf32, #tpu.memory_space<vmem>>, %arg4: memref<128x128xf32, #tpu.memory_space<vmem>>, %arg5: memref<3x128xf32, #tpu.memory_space<vmem>>, %arg6: memref<8x128xf32, #tpu.memory_space<vmem>>) attributes {dimension_semantics = [#tpu.dimension_semantics<arbitrary>], iteration_bounds = array<i64: 1>, scalar_prefetch = 0 : i64, scratch_operands = 0 : i64, tpu.core_type = #tpu.core_type<tc>, window_params = [{pipeline_mode = #tpu.pipeline_mode<synchronous>, transform_indices = @transform_0, window_bounds = array<i64: 8, 32>}, {pipeline_mode = #tpu.pipeline_mode<synchronous>, transform_indices = @transform_1, window_bounds = array<i64: 32, 128>}, {pipeline_mode = #tpu.pipeline_mode<synchronous>, transform_indices = @transform_2, window_bounds = array<i64: 3, 128>}, {pipeline_mode = #tpu.pipeline_mode<synchronous>, transform_indices = @transform_3, window_bounds = array<i64: 128, 128>}, {pipeline_mode = #tpu.pipeline_mode<synchronous>, transform_indices = @transform_4, window_bounds = array<i64: 3, 128>}, {pipeline_mode = #tpu.pipeline_mode<synchronous>, transform_indices = @transform_5, window_bounds = array<i64: 8, 128>}]} {
    %c0 = arith.constant 0 : index
    %c0_0 = arith.constant 0 : index
    %0 = vector.load %arg1[%c0, %c0_0] : memref<8x32xf32, #tpu.memory_space<vmem>>, vector<8x32xf32>
    %c0_1 = arith.constant 0 : index
    %c0_2 = arith.constant 0 : index
    %1 = vector.load %arg2[%c0_1, %c0_2] : memref<32x128xf32, #tpu.memory_space<vmem>>, vector<32x128xf32>
    %c0_3 = arith.constant 0 : index
    %c0_4 = arith.constant 0 : index
    %2 = vector.load %arg3[%c0_3, %c0_4] : memref<3x128xf32, #tpu.memory_space<vmem>>, vector<3x128xf32>
    %cst = arith.constant dense<0.000000e+00> : vector<8x128xf32>
    %3 = tpu.matmul %0, %1, %cst {dimension_numbers = #tpu.dot_dimension_numbers<[1], [0], [0], [1], [0, 0, 1, 1], [], []>} : vector<8x32xf32>, vector<32x128xf32>, vector<8x128xf32> -> vector<8x128xf32>
    %4 = vector.extract_strided_slice %2 {offsets = [0, 0], sizes = [1, 128], strides = [1, 1]} : vector<3x128xf32> to vector<1x128xf32>
    %5 = vector.broadcast %4 : vector<1x128xf32> to vector<8x128xf32>
    %6 = arith.addf %3, %5 : vector<8x128xf32>
    %cst_5 = arith.constant dense<0.000000e+00> : vector<128xf32>
    %7 = vector.multi_reduction <add>, %6, %cst_5 [0] : vector<8x128xf32> to vector<128xf32>
    %8 = vector.shape_cast %7 : vector<128xf32> to vector<1x128xf32>
    %cst_6 = arith.constant 1.250000e-01 : f32
    %9 = vector.broadcast %cst_6 : f32 to vector<1x128xf32>
    %10 = arith.mulf %8, %9 : vector<1x128xf32>
    %11 = arith.mulf %6, %6 : vector<8x128xf32>
    %cst_7 = arith.constant dense<0.000000e+00> : vector<128xf32>
    %12 = vector.multi_reduction <add>, %11, %cst_7 [0] : vector<8x128xf32> to vector<128xf32>
    %13 = vector.shape_cast %12 : vector<128xf32> to vector<1x128xf32>
    %cst_8 = arith.constant 1.250000e-01 : f32
    %14 = vector.broadcast %cst_8 : f32 to vector<1x128xf32>
    %15 = arith.mulf %13, %14 : vector<1x128xf32>
    %16 = arith.mulf %10, %10 : vector<1x128xf32>
    %17 = arith.subf %15, %16 : vector<1x128xf32>
    %cst_9 = arith.constant 0.000000e+00 : f32
    %18 = vector.broadcast %cst_9 : f32 to vector<1x128xf32>
    %19 = arith.maximumf %17, %18 : vector<1x128xf32>
    %20 = vector.broadcast %10 : vector<1x128xf32> to vector<8x128xf32>
    %21 = arith.subf %6, %20 : vector<8x128xf32>
    %cst_10 = arith.constant 9.99999974E-6 : f32
    %22 = vector.broadcast %cst_10 : f32 to vector<1x128xf32>
    %23 = arith.addf %19, %22 : vector<1x128xf32>
    %24 = math.rsqrt %23 : vector<1x128xf32>
    %25 = vector.broadcast %24 : vector<1x128xf32> to vector<8x128xf32>
    %26 = arith.mulf %21, %25 : vector<8x128xf32>
    %27 = vector.extract_strided_slice %2 {offsets = [1, 0], sizes = [1, 128], strides = [1, 1]} : vector<3x128xf32> to vector<1x128xf32>
    %28 = vector.broadcast %27 : vector<1x128xf32> to vector<8x128xf32>
    %29 = arith.mulf %26, %28 : vector<8x128xf32>
    %30 = vector.extract_strided_slice %2 {offsets = [2, 0], sizes = [1, 128], strides = [1, 1]} : vector<3x128xf32> to vector<1x128xf32>
    %31 = vector.broadcast %30 : vector<1x128xf32> to vector<8x128xf32>
    %32 = arith.addf %29, %31 : vector<8x128xf32>
    %cst_11 = arith.constant 0.000000e+00 : f32
    %33 = vector.broadcast %cst_11 : f32 to vector<8x128xf32>
    %34 = arith.maximumf %32, %33 : vector<8x128xf32>
    %c0_12 = arith.constant 0 : index
    %c0_13 = arith.constant 0 : index
    %35 = vector.load %arg4[%c0_12, %c0_13] : memref<128x128xf32, #tpu.memory_space<vmem>>, vector<128x128xf32>
    %c0_14 = arith.constant 0 : index
    %c0_15 = arith.constant 0 : index
    %36 = vector.load %arg5[%c0_14, %c0_15] : memref<3x128xf32, #tpu.memory_space<vmem>>, vector<3x128xf32>
    %cst_16 = arith.constant dense<0.000000e+00> : vector<8x128xf32>
    %37 = tpu.matmul %34, %35, %cst_16 {dimension_numbers = #tpu.dot_dimension_numbers<[1], [0], [0], [1], [0, 0, 1, 1], [], []>} : vector<8x128xf32>, vector<128x128xf32>, vector<8x128xf32> -> vector<8x128xf32>
    %38 = vector.extract_strided_slice %36 {offsets = [0, 0], sizes = [1, 128], strides = [1, 1]} : vector<3x128xf32> to vector<1x128xf32>
    %39 = vector.broadcast %38 : vector<1x128xf32> to vector<8x128xf32>
    %40 = arith.addf %37, %39 : vector<8x128xf32>
    %cst_17 = arith.constant dense<0.000000e+00> : vector<128xf32>
    %41 = vector.multi_reduction <add>, %40, %cst_17 [0] : vector<8x128xf32> to vector<128xf32>
    %42 = vector.shape_cast %41 : vector<128xf32> to vector<1x128xf32>
    %cst_18 = arith.constant 1.250000e-01 : f32
    %43 = vector.broadcast %cst_18 : f32 to vector<1x128xf32>
    %44 = arith.mulf %42, %43 : vector<1x128xf32>
    %45 = arith.mulf %40, %40 : vector<8x128xf32>
    %cst_19 = arith.constant dense<0.000000e+00> : vector<128xf32>
    %46 = vector.multi_reduction <add>, %45, %cst_19 [0] : vector<8x128xf32> to vector<128xf32>
    %47 = vector.shape_cast %46 : vector<128xf32> to vector<1x128xf32>
    %cst_20 = arith.constant 1.250000e-01 : f32
    %48 = vector.broadcast %cst_20 : f32 to vector<1x128xf32>
    %49 = arith.mulf %47, %48 : vector<1x128xf32>
    %50 = arith.mulf %44, %44 : vector<1x128xf32>
    %51 = arith.subf %49, %50 : vector<1x128xf32>
    %cst_21 = arith.constant 0.000000e+00 : f32
    %52 = vector.broadcast %cst_21 : f32 to vector<1x128xf32>
    %53 = arith.maximumf %51, %52 : vector<1x128xf32>
    %54 = vector.broadcast %44 : vector<1x128xf32> to vector<8x128xf32>
    %55 = arith.subf %40, %54 : vector<8x128xf32>
    %cst_22 = arith.constant 9.99999974E-6 : f32
    %56 = vector.broadcast %cst_22 : f32 to vector<1x128xf32>
    %57 = arith.addf %53, %56 : vector<1x128xf32>
    %58 = math.rsqrt %57 : vector<1x128xf32>
    %59 = vector.broadcast %58 : vector<1x128xf32> to vector<8x128xf32>
    %60 = arith.mulf %55, %59 : vector<8x128xf32>
    %61 = vector.extract_strided_slice %36 {offsets = [1, 0], sizes = [1, 128], strides = [1, 1]} : vector<3x128xf32> to vector<1x128xf32>
    %62 = vector.broadcast %61 : vector<1x128xf32> to vector<8x128xf32>
    %63 = arith.mulf %60, %62 : vector<8x128xf32>
    %64 = vector.extract_strided_slice %36 {offsets = [2, 0], sizes = [1, 128], strides = [1, 1]} : vector<3x128xf32> to vector<1x128xf32>
    %65 = vector.broadcast %64 : vector<1x128xf32> to vector<8x128xf32>
    %66 = arith.addf %63, %65 : vector<8x128xf32>
    %c0_23 = arith.constant 0 : index
    %c0_24 = arith.constant 0 : index
    %67 = vector.load %arg6[%c0_23, %c0_24] : memref<8x128xf32, #tpu.memory_space<vmem>>, vector<8x128xf32>
    tpu.vector_store %arg6[%c0_23, %c0_24], %66 {strides = array<i32>} : memref<8x128xf32, #tpu.memory_space<vmem>>, vector<8x128xf32>,
    return
  }
  func.func @transform_0(%arg0: i32) -> (i32, i32) {
    %c0_i32 = arith.constant 0 : i32
    %c0_i32_0 = arith.constant 0 : i32
    %c0_i32_1 = arith.constant 0 : i32
    return %c0_i32, %c0_i32_0 : i32, i32
  }
  func.func @transform_1(%arg0: i32) -> (i32, i32) {
    %c0_i32 = arith.constant 0 : i32
    %c0_i32_0 = arith.constant 0 : i32
    %c0_i32_1 = arith.constant 0 : i32
    return %c0_i32, %c0_i32_0 : i32, i32
  }
  func.func @transform_2(%arg0: i32) -> (i32, i32) {
    %c0_i32 = arith.constant 0 : i32
    %c0_i32_0 = arith.constant 0 : i32
    %c0_i32_1 = arith.constant 0 : i32
    return %c0_i32, %c0_i32_0 : i32, i32
  }
  func.func @transform_3(%arg0: i32) -> (i32, i32) {
    %c0_i32 = arith.constant 0 : i32
    %c0_i32_0 = arith.constant 0 : i32
    %c0_i32_1 = arith.constant 0 : i32
    return %c0_i32, %c0_i32_0 : i32, i32
  }
  func.func @transform_4(%arg0: i32) -> (i32, i32) {
    %c0_i32 = arith.constant 0 : i32
    %c0_i32_0 = arith.constant 0 : i32
    %c0_i32_1 = arith.constant 0 : i32
    return %c0_i32, %c0_i32_0 : i32, i32
  }
  func.func @transform_5(%arg0: i32) -> (i32, i32) {
    %c0_i32 = arith.constant 0 : i32
    %c0_i32_0 = arith.constant 0 : i32
    %c0_i32_1 = arith.constant 0 : i32
    return %c0_i32, %c0_i32_0 : i32, i32
  }
}

</mosaic_0001>

<llo_original>
// kernel: tpu_custom_call.1
$region0: #{tpu_custom_call.1}
  #allocation0 [shape = 'u32[]', space=smem, size = 0x4, offset = 0x4, fixed_abs, tag = 'smem constant byte address 0x4 - core index']
  #allocation1 [shape = 'u32[144,128]{1,0:T(1,128)}', space=vmem, size = 0x12000, scoped, tag = 'internal scratch']
  %s0 = inlined_call_operand.hbm [shape: f32[8,32], index: 0, kind: input, shape index: {}]
  %s1 = inlined_call_operand.hbm [shape: f32[32,128], index: 1, kind: input, shape index: {}]
  %s2 = inlined_call_operand.vmem [shape: f32[3,128], index: 2, kind: input, shape index: {}]
  %s3 = inlined_call_operand.hbm [shape: f32[128,128], index: 3, kind: input, shape index: {}]
  %s4 = inlined_call_operand.vmem [shape: f32[3,128], index: 4, kind: input, shape index: {}]
  %s5 = inlined_call_operand.hbm [shape: f32[8,128], index: 5, kind: output, shape index: {}]
  %s6 = sld [smem:[#allocation0]]
  $region42: #{tpu_custom_call.1} parent=0
    _
  %s8 = ssub.s32 1, %s6
  %s9 = scalar_select 0, %s8, %s6
  $region1: #{tpu_custom_call.1} parent=0
    #allocation2 [shape = 'u8[4096]{0}', space=vmem, size = 0x1000, scoped, tag = 'input window, operand 0, single buffered']
    #allocation3 [shape = 's32[1]{0}', space=sflag, size = 0x4, scoped, tag = 'scoped memory for tpu_custom_call.1']
    #allocation4 [shape = 's32[1]{0}', space=sflag, size = 0x4, scoped, tag = 'scoped memory for tpu_custom_call.1']
    #allocation5 [shape = 'u8[16384]{0}', space=vmem, size = 0x4000, scoped, tag = 'input window, operand 1, single buffered']
    #allocation6 [shape = 's32[1]{0}', space=sflag, size = 0x4, scoped, tag = 'scoped memory for tpu_custom_call.1']
    #allocation7 [shape = 'u8[65536]{0}', space=vmem, size = 0x10000, scoped, tag = 'input window, operand 3, single buffered']
    #allocation8 [shape = 'u8[4096]{0}', space=vmem, size = 0x1000, scoped, tag = 'output window, operand 0, single buffered']
    %10 = vsyncpa [#allocation3], 0
    %11 = vsyncpa [#allocation6], 0
    %12 = vsyncpa [#allocation4], 0
    // Predicated region
    $region2: #{tpu_custom_call.1} parent=1 // pred_check
      _
    $region3: #{tpu_custom_call.1} parent=1 // pred_check_branch
      %14 = sbr.rel (0) target = $region5
    $region4: #{tpu_custom_call.1} parent=1 // pred_region
      %s16 = ssub.s32 128, 128
      %17 = vsyncadd [#allocation3], %s16
      %s19 = sshll.u32 [#allocation2], 4
      %s20 = int_to_ptr.vmem [resolvable:$true] %s19
      %22 = dma.hbm_to_vmem [thread:$0]  %s0, 128, %s20, [#allocation3]
    $region5: #{tpu_custom_call.1} parent=1 // pred_fallthru
      _
    // Predicated region
    $region6: #{tpu_custom_call.1} parent=1 // pred_check
      _
    $region7: #{tpu_custom_call.1} parent=1 // pred_check_branch
      %24 = sbr.rel (0) target = $region9
    $region8: #{tpu_custom_call.1} parent=1 // pred_region
      %s26 = ssub.s32 512, 512
      %27 = vsyncadd [#allocation6], %s26
      %s28 = sshll.u32 [#allocation5], 4
      %s29 = int_to_ptr.vmem [resolvable:$true] %s28
      %34 = dma.hbm_to_vmem [thread:$0]  %s1, 512, %s29, [#allocation6], 128, 128, 8
    $region9: #{tpu_custom_call.1} parent=1 // pred_fallthru
      _
    // Predicated region
    $region10: #{tpu_custom_call.1} parent=1 // pred_check
      _
    $region11: #{tpu_custom_call.1} parent=1 // pred_check_branch
      %36 = sbr.rel (0) target = $region13
    $region12: #{tpu_custom_call.1} parent=1 // pred_region
      _
    $region13: #{tpu_custom_call.1} parent=1 // pred_fallthru
      _
    // Predicated region
    $region14: #{tpu_custom_call.1} parent=1 // pred_check
      _
    $region15: #{tpu_custom_call.1} parent=1 // pred_check_branch
      %38 = sbr.rel (0) target = $region17
    $region16: #{tpu_custom_call.1} parent=1 // pred_region
      %s40 = ssub.s32 2048, 2048
      %41 = vsyncadd [#allocation6], %s40
      %s42 = sshll.u32 [#allocation7], 4
      %s43 = int_to_ptr.vmem [resolvable:$true] %s42
      %48 = dma.hbm_to_vmem [thread:$0]  %s3, 2048, %s43, [#allocation6], 128, 128, 8
    $region17: #{tpu_custom_call.1} parent=1 // pred_fallthru
      _
    // Predicated region
    $region18: #{tpu_custom_call.1} parent=1 // pred_check
      _
    $region19: #{tpu_custom_call.1} parent=1 // pred_check_branch
      %50 = sbr.rel (0) target = $region21
    $region20: #{tpu_custom_call.1} parent=1 // pred_region
      _
    $region21: #{tpu_custom_call.1} parent=1 // pred_fallthru
      _
    // Predicated region
    $region22: #{tpu_custom_call.1} parent=1 // pred_check
      _
    $region23: #{tpu_custom_call.1} parent=1 // pred_check_branch
      %52 = sbr.rel (0) target = $region25
    $region24: #{tpu_custom_call.1} parent=1 // pred_region
      %53 = dma.done [#allocation3], 128
    $region25: #{tpu_custom_call.1} parent=1 // pred_fallthru
      _
    // Predicated region
    $region26: #{tpu_custom_call.1} parent=1 // pred_check
      _
    $region27: #{tpu_custom_call.1} parent=1 // pred_check_branch
      %55 = sbr.rel (0) target = $region29
    $region28: #{tpu_custom_call.1} parent=1 // pred_region
      %56 = dma.done [#allocation6], 512
    $region29: #{tpu_custom_call.1} parent=1 // pred_fallthru
      _
    // Predicated region
    $region30: #{tpu_custom_call.1} parent=1 // pred_check
      _
    $region31: #{tpu_custom_call.1} parent=1 // pred_check_branch
      %58 = sbr.rel (0) target = $region33
    $region32: #{tpu_custom_call.1} parent=1 // pred_region
      %59 = dma.done [#allocation6], 2048
    $region33: #{tpu_custom_call.1} parent=1 // pred_fallthru
      _
    %v60 = vld [vmem:[#allocation2] sm:$0xff]
    %v61 = vld [vmem:[#allocation5] sm:$0xff]
    %v62 = vld [vmem:[#allocation5 + $0x8] sm:$0xff]
    %v63 = vld [vmem:[#allocation5 + $0x10] sm:$0xff]
    %v64 = vld [vmem:[#allocation5 + $0x18] sm:$0xff]
    %v65 = vld [vmem:[%s2] sm:$0x7]
    %v66 = vlaneseq
    %v67 = vshrl.u32 %v66, 7
    %v68 = vsub.s32 0, %v67
    %v69 = vrot.slane %v65, %v68
    %vm70 = vcmask 261120
    %v72 = vsel %vm70, %v60, 0
    %74 = vmatprep.subr.mxu0 0.0
    %75 = vmatpush1.msra.mxu0 %v61
    %76 = vmatprep.subr.mxu0 0.0
    %77 = vmatpush1.msra.mxu0 %v62
    %78 = vmatprep.subr.mxu0 0.0
    %79 = vmatpush1.msra.mxu0 %v63
    %80 = vmatprep.subr.mxu0 0.0
    %81 = vmatpush1.msra.mxu0 %v64
    %82 = vmatprep.subr.mxu0 0.0
    %83 = vmatpush1.msra.mxu0 0.0
    %84 = vmatprep.subr.mxu0 0.0
    %85 = vmatpush1.msra.mxu0 0.0
    %86 = vmatprep.subr.mxu0 0.0
    %87 = vmatpush1.msra.mxu0 0.0
    %88 = vmatprep.subr.mxu0 0.0
    %89 = vmatpush1.msra.mxu0 0.0
    %90 = vmatprep.subr.mxu0 0.0
    %91 = vmatpush1.msra.mxu0 0.0
    %92 = vmatprep.subr.mxu0 0.0
    %93 = vmatpush1.msra.mxu0 0.0
    %94 = vmatprep.subr.mxu0 0.0
    %95 = vmatpush1.msra.mxu0 0.0
    %96 = vmatprep.subr.mxu0 0.0
    %97 = vmatpush1.msra.mxu0 0.0
    %98 = vmatprep.subr.mxu0 0.0
    %99 = vmatpush1.msra.mxu0 0.0
    %100 = vmatprep.subr.mxu0 0.0
    %101 = vmatpush1.msra.mxu0 0.0
    %102 = vmatprep.subr.mxu0 0.0
    %103 = vmatpush1.msra.mxu0 0.0
    %104 = vmatprep.subr.mxu0 0.0
    %105 = vmatpush1.msra.mxu0 0.0
    %106 = vmatprep.subr.mxu0 0.0
    %107 = vmatpush1.msra.mxu0 0.0
    %108 = vmatprep.subr.mxu0 0.0
    %109 = vmatpush1.msra.mxu0 0.0
    %110 = vmatprep.subr.mxu0 0.0
    %111 = vmatpush1.msra.mxu0 0.0
    %112 = vmatprep.subr.mxu0 0.0
    %113 = vmatpush1.msra.mxu0 0.0
    %114 = vmatprep.subr.mxu0 0.0
    %115 = vmatpush1.msra.mxu0 0.0
    %116 = vmatprep.subr.mxu0 0.0
    %117 = vmatpush1.msra.mxu0 0.0
    %118 = vmatprep.subr.mxu0 0.0
    %119 = vmatpush1.msra.mxu0 0.0
    %120 = vmatprep.subr.mxu0 0.0
    %121 = vmatpush1.msra.mxu0 0.0
    %122 = vmatprep.subr.mxu0 0.0
    %123 = vmatpush1.msra.mxu0 0.0
    %124 = vmatprep.subr.mxu0 0.0
    %125 = vmatpush1.msra.mxu0 0.0
    %126 = vmatprep.subr.mxu0 0.0
    %127 = vmatpush1.msra.mxu0 0.0
    %128 = vmatprep.subr.mxu0 0.0
    %129 = vmatpush1.msra.mxu0 0.0
    %130 = vmatprep.subr.mxu0 0.0
    %131 = vmatpush1.msra.mxu0 0.0
    %132 = vmatprep.subr.mxu0 0.0
    %133 = vmatpush1.msra.mxu0 0.0
    %134 = vmatprep.subr.mxu0 0.0
    %135 = vmatpush1.msra.mxu0 0.0
    %136 = vmatprep.subr.mxu0 0.0
    %137 = vmatpush1.msra.mxu0 0.0
    %138 = vmatprep.mubr.f32.mxu0 0.0
    %139 = vmatmul.mubr.f32.gmra.mrb[0].mxu0 %v72
    %v140 = vpop.f32.mrb[0].mxu0
    %v141 = vadd.f32 %v69, %v140
    %v142 = vpop.f32.mrb[0].mxu0
    %143 = vdwg.mxu0
    %v144 = vrot.slane %v141, 4
    %v145 = vadd.f32 %v141, %v144
    %v146 = vrot.slane %v145, 2
    %v147 = vadd.f32 %v145, %v146
    %v148 = vrot.slane %v147, 1
    %v149 = vadd.f32 %v147, %v148
    %v150 = vmul.f32 %v149, 0.125
    %v151 = vmul.f32 %v141, %v141
    %v152 = vrot.slane %v151, 4
    %v153 = vadd.f32 %v151, %v152
    %v154 = vrot.slane %v153, 2
    %v155 = vadd.f32 %v153, %v154
    %v156 = vrot.slane %v155, 1
    %v157 = vadd.f32 %v155, %v156
    %v158 = vmul.f32 %v157, 0.125
    %v159 = vmul.f32 %v150, %v150
    %v160 = vsub.f32 %v158, %v159
    %v161 = vmax.f32 %v160, 0.0
    %v162 = vsub.f32 %v141, %v150
    %v163 = vadd.f32 %v161, 1e-05
    %v164 = vrsqrt.pop %v163
    %v165 = vmul.f32 %v162, %v164
    %v166 = vlaneseq
    %v167 = vshrl.u32 %v166, 7
    %v168 = vsub.s32 1, %v167
    %v169 = vrot.slane %v65, %v168
    %v170 = vmul.f32 %v165, %v169
    %v171 = vlaneseq
    %v172 = vshrl.u32 %v171, 7
    %v173 = vsub.s32 2, %v172
    %v174 = vrot.slane %v65, %v173
    %v175 = vadd.f32 %v170, %v174
    %v176 = vmax.f32 %v175, 0.0
    %v177 = vld [vmem:[#allocation7] sm:$0xff]
    %v178 = vld [vmem:[#allocation7 + $0x8] sm:$0xff]
    %v179 = vld [vmem:[#allocation7 + $0x10] sm:$0xff]
    %v180 = vld [vmem:[#allocation7 + $0x18] sm:$0xff]
    %v181 = vld [vmem:[#allocation7 + $0x20] sm:$0xff]
    %v182 = vld [vmem:[#allocation7 + $0x28] sm:$0xff]
    %v183 = vld [vmem:[#allocation7 + $0x30] sm:$0xff]
    %v184 = vld [vmem:[#allocation7 + $0x38] sm:$0xff]
    %v185 = vld [vmem:[#allocation7 + $0x40] sm:$0xff]
    %v186 = vld [vmem:[#allocation7 + $0x48] sm:$0xff]
    %v187 = vld [vmem:[#allocation7 + $0x50] sm:$0xff]
    %v188 = vld [vmem:[#allocation7 + $0x58] sm:$0xff]
    %v189 = vld [vmem:[#allocation7 + $0x60] sm:$0xff]
    %v190 = vld [vmem:[#allocation7 + $0x68] sm:$0xff]
    %v191 = vld [vmem:[#allocation7 + $0x70] sm:$0xff]
    %v192 = vld [vmem:[#allocation7 + $0x78] sm:$0xff]
    %v193 = vld [vmem:[%s4] sm:$0x7]
    %v194 = vlaneseq
    %v195 = vshrl.u32 %v194, 7
    %v196 = vsub.s32 0, %v195
    %v197 = vrot.slane %v193, %v196
    %198 = vmatprep.subr.mxu0 0.0
    %199 = vmatpush1.msra.mxu0 %v177
    %200 = vmatprep.subr.mxu0 0.0
    %201 = vmatpush1.msra.mxu0 %v178
    %202 = vmatprep.subr.mxu0 0.0
    %203 = vmatpush1.msra.mxu0 %v179
    %204 = vmatprep.subr.mxu0 0.0
    %205 = vmatpush1.msra.mxu0 %v180
    %206 = vmatprep.subr.mxu0 0.0
    %207 = vmatpush1.msra.mxu0 %v181
    %208 = vmatprep.subr.mxu0 0.0
    %209 = vmatpush1.msra.mxu0 %v182
    %210 = vmatprep.subr.mxu0 0.0
    %211 = vmatpush1.msra.mxu0 %v183
    %212 = vmatprep.subr.mxu0 0.0
    %213 = vmatpush1.msra.mxu0 %v184
    %214 = vmatprep.subr.mxu0 0.0
    %215 = vmatpush1.msra.mxu0 %v185
    %216 = vmatprep.subr.mxu0 0.0
    %217 = vmatpush1.msra.mxu0 %v186
    %218 = vmatprep.subr.mxu0 0.0
    %219 = vmatpush1.msra.mxu0 %v187
    %220 = vmatprep.subr.mxu0 0.0
    %221 = vmatpush1.msra.mxu0 %v188
    %222 = vmatprep.subr.mxu0 0.0
    %223 = vmatpush1.msra.mxu0 %v189
    %224 = vmatprep.subr.mxu0 0.0
    %225 = vmatpush1.msra.mxu0 %v190
    %226 = vmatprep.subr.mxu0 0.0
    %227 = vmatpush1.msra.mxu0 %v191
    %228 = vmatprep.subr.mxu0 0.0
    %229 = vmatpush1.msra.mxu0 %v192
    %230 = vmatprep.subr.mxu0 0.0
    %231 = vmatpush1.msra.mxu0 0.0
    %232 = vmatprep.subr.mxu0 0.0
    %233 = vmatpush1.msra.mxu0 0.0
    %234 = vmatprep.subr.mxu0 0.0
    %235 = vmatpush1.msra.mxu0 0.0
    %236 = vmatprep.subr.mxu0 0.0
    %237 = vmatpush1.msra.mxu0 0.0
    %238 = vmatprep.subr.mxu0 0.0
    %239 = vmatpush1.msra.mxu0 0.0
    %240 = vmatprep.subr.mxu0 0.0
    %241 = vmatpush1.msra.mxu0 0.0
    %242 = vmatprep.subr.mxu0 0.0
    %243 = vmatpush1.msra.mxu0 0.0
    %244 = vmatprep.subr.mxu0 0.0
    %245 = vmatpush1.msra.mxu0 0.0
    %246 = vmatprep.subr.mxu0 0.0
    %247 = vmatpush1.msra.mxu0 0.0
    %248 = vmatprep.subr.mxu0 0.0
    %249 = vmatpush1.msra.mxu0 0.0
    %250 = vmatprep.subr.mxu0 0.0
    %251 = vmatpush1.msra.mxu0 0.0
    %252 = vmatprep.subr.mxu0 0.0
    %253 = vmatpush1.msra.mxu0 0.0
    %254 = vmatprep.subr.mxu0 0.0
    %255 = vmatpush1.msra.mxu0 0.0
    %256 = vmatprep.subr.mxu0 0.0
    %257 = vmatpush1.msra.mxu0 0.0
    %258 = vmatprep.subr.mxu0 0.0
    %259 = vmatpush1.msra.mxu0 0.0
    %260 = vmatprep.subr.mxu0 0.0
    %261 = vmatpush1.msra.mxu0 0.0
    %262 = vmatprep.mubr.f32.mxu0 0.0
    %263 = vmatmul.mubr.f32.gmra.mrb[0].mxu0 %v176
    %v264 = vpop.f32.mrb[0].mxu0
    %v265 = vadd.f32 %v197, %v264
    %v266 = vpop.f32.mrb[0].mxu0
    %267 = vdwg.mxu0
    %v268 = vrot.slane %v265, 4
    %v269 = vadd.f32 %v265, %v268
    %v270 = vrot.slane %v269, 2
    %v271 = vadd.f32 %v269, %v270
    %v272 = vrot.slane %v271, 1
    %v273 = vadd.f32 %v271, %v272
    %v274 = vmul.f32 %v273, 0.125
    %v275 = vmul.f32 %v265, %v265
    %v276 = vrot.slane %v275, 4
    %v277 = vadd.f32 %v275, %v276
    %v278 = vrot.slane %v277, 2
    %v279 = vadd.f32 %v277, %v278
    %v280 = vrot.slane %v279, 1
    %v281 = vadd.f32 %v279, %v280
    %v282 = vmul.f32 %v281, 0.125
    %v283 = vmul.f32 %v274, %v274
    %v284 = vsub.f32 %v282, %v283
    %v285 = vmax.f32 %v284, 0.0
    %v286 = vsub.f32 %v265, %v274
    %v287 = vadd.f32 %v285, 1e-05
    %v288 = vrsqrt.pop %v287
    %v289 = vmul.f32 %v286, %v288
    %v290 = vlaneseq
    %v291 = vshrl.u32 %v290, 7
    %v292 = vsub.s32 1, %v291
    %v293 = vrot.slane %v193, %v292
    %v294 = vmul.f32 %v289, %v293
    %v295 = vlaneseq
    %v296 = vshrl.u32 %v295, 7
    %v297 = vsub.s32 2, %v296
    %v298 = vrot.slane %v193, %v297
    %v299 = vadd.f32 %v294, %v298
    %300 = vst [vmem:[#allocation8] sm:$0xff] %v299
    // Predicated region
    $region34: #{tpu_custom_call.1} parent=1 // pred_check
      _
    $region35: #{tpu_custom_call.1} parent=1 // pred_check_branch
      %302 = sbr.rel (0) target = $region37
    $region36: #{tpu_custom_call.1} parent=1 // pred_region
      %s304 = ssub.s32 128, 128
      %305 = vsyncadd [#allocation4], %s304
      %s307 = sshll.u32 [#allocation8], 4
      %s308 = int_to_ptr.vmem [resolvable:$true] %s307
      %310 = dma.vmem_to_hbm [thread:$0]  %s308, 128, %s5, [#allocation4]
    $region37: #{tpu_custom_call.1} parent=1 // pred_fallthru
      _
    // Predicated region
    $region38: #{tpu_custom_call.1} parent=1 // pred_check
      _
    $region39: #{tpu_custom_call.1} parent=1 // pred_check_branch
      %312 = sbr.rel (0) target = $region41
    $region40: #{tpu_custom_call.1} parent=1 // pred_region
      %313 = dma.done [#allocation4], 128
    $region41: #{tpu_custom_call.1} parent=1 // pred_fallthru
      _
    %314 = vsyncpa [#allocation3], 1
    %315 = vsyncpa [#allocation6], 1
    %316 = vsyncpa [#allocation4], 1

</llo_original>
